<compile_context>
chip_gen: v6e
topology: v6e:2x2x1
jax: 0.10.0
libtpu: 0.0.40
codegen_flags: <defaults>
</compile_context>

<pallas_src>
import jax
import jax.numpy as jnp
from jax.experimental import pallas as pl
from jax.experimental.pallas import tpu as pltpu


def _bilstm_pos_enc_kernel(f_ref, b_ref, fpe_ref, bpe_ref, twf_ref, twb_ref,
                           fo_ref, bo_ref):
    # f_ref / b_ref:     (TB, TL)  batch x lane tile of the flattened features
    # fpe_ref / bpe_ref: (1,  TL)  positional-embedding slabs (flattened)
    # twf_ref / twb_ref: (1,  TL)  temporal-weight logits (fwd / seq-reversed),
    #                              pre-expanded over hidden in the wrapper
    w_f = jax.nn.sigmoid(twf_ref[...])            # EUP, hidden under DMA stream
    w_b = jax.nn.sigmoid(twb_ref[...])
    fo_ref[...] = (f_ref[...] + fpe_ref[...]) * w_f   # fused add-mul, direct store
    bo_ref[...] = (b_ref[...] + bpe_ref[...]) * w_b


def _round_up(x, m):
    return -(-x // m) * m


def _vmem_limit_bytes():
    """Scoped-VMEM limit with headroom: ~48 MiB on v7x (64 MiB physical),
    ~96 MiB on v5e/v6e (128 MiB physical).  Conservative fallback if the
    hardware query is unavailable."""
    try:
        cap = int(pltpu.get_tpu_info().vmem_capacity_bytes)
    except Exception:
        cap = 64 << 20
    return min(cap * 3 // 4, 100 << 20)


def _pick_tiles(B, SH_pad, itemsize, vmem_limit):
    """Pick (batch_tile, lane_tile) for the 2-D grid.

    Targets ~2 MiB per buffer (live set ~= 8x tile + tiny slabs), dtype-aware
    sublane alignment, and >=8 batch grid steps when B is large enough so the
    pipeline overlaps and both v7x TensorCores get work.
    """
    sub = max(8, 32 // itemsize)                 # f32->8, bf16->16, int8/fp8->32
    tile_budget = max(64 << 10, min(2 << 20, (vmem_limit - (1 << 20)) // 8))

    # Lane tile: whole (padded) S*H if `sub` rows of it fit the budget,
    # otherwise a multiple of 128 sized so `sub` rows stay within budget.
    if sub * SH_pad * itemsize <= tile_budget:
        tl = SH_pad
    else:
        tl = max(128, (tile_budget // (sub * itemsize)) // 128 * 128)
        tl = min(tl, SH_pad)

    # Batch tile from the byte budget, sublane-aligned.
    tb = max(sub, (tile_budget // (tl * itemsize)) // sub * sub)
    # Many (>=8) batch steps when B is big: pipelining + 2 TCs on v7x.
    if B > 8 * sub:
        tb = min(tb, max(sub, (-(-B // 8)) // sub * sub))
    tb = min(tb, B)                              # tiny B -> full-dim block
    return tb, tl


def bilstm_positional_encoding(forward_features, backward_features,
                               forward_pos_embed, backward_pos_embed,
                               temporal_weights):
    """forward_features, backward_features: [B, S, H].
    forward_pos_embed, backward_pos_embed: [1, max_len, H].
    temporal_weights: [1, max_len, 1]."""
    B, S, H = forward_features.shape
    SH = S * H
    dtype = forward_features.dtype
    itemsize = jnp.dtype(dtype).itemsize

    # ---- wrapper-side layout plumbing (no feature math happens here) ----
    SH_pad = _round_up(SH, 128)                  # keep stores full-width

    def flat_pad(x3d):
        x = x3d.reshape(x3d.shape[0], SH)
        if SH_pad != SH:
            x = jnp.pad(x, ((0, 0), (0, SH_pad - SH)))
        return x

    f_flat = flat_pad(forward_features)
    b_flat = flat_pad(backward_features)
    fpe = flat_pad(forward_pos_embed[:, :S, :].astype(dtype))
    bpe = flat_pad(backward_pos_embed[:, :S, :].astype(dtype))
    tw = temporal_weights[0, :S, :].astype(dtype)                    # (S,1) logits
    twf = flat_pad(jnp.broadcast_to(tw, (S, H))[None])               # (1, SH_pad)
    twb = flat_pad(jnp.broadcast_to(tw[::-1, :], (S, H))[None])      # reversed slab

    vmem_limit = _vmem_limit_bytes()
    TB, TL = _pick_tiles(B, SH_pad, itemsize, vmem_limit)
    grid = (pl.cdiv(B, TB), pl.cdiv(SH_pad, TL))   # (batch tiles, lane tiles)

    feat_spec = pl.BlockSpec((TB, TL), lambda i, j: (i, j))
    slab_spec = pl.BlockSpec((1, TL), lambda i, j: (0, j))   # batch-invariant

    out_shape = (
        jax.ShapeDtypeStruct((B, SH_pad), dtype),
        jax.ShapeDtypeStruct((B, SH_pad), dtype),
    )

    fn = pl.pallas_call(
        _bilstm_pos_enc_kernel,
        out_shape=out_shape,
        grid_spec=pltpu.PrefetchScalarGridSpec(
            num_scalar_prefetch=0,
            grid=grid,
            in_specs=[feat_spec, feat_spec,
                      slab_spec, slab_spec, slab_spec, slab_spec],
            out_specs=[feat_spec, feat_spec],
        ),
        compiler_params=pltpu.CompilerParams(
            dimension_semantics=("parallel", "parallel"),
            vmem_limit_bytes=vmem_limit),
    )
    fo, bo = fn(f_flat, b_flat, fpe, bpe, twf, twb)
    if SH_pad != SH:
        fo = fo[:, :SH]
        bo = bo[:, :SH]
    return fo.reshape(B, S, H), bo.reshape(B, S, H)


def _reference(forward_features, backward_features, fpe, bpe, tw):
    """Pure-JAX reference mirroring the PyTorch forward pass."""
    S = forward_features.shape[1]
    f_enc = forward_features + fpe[:, :S, :]
    b_enc = backward_features + bpe[:, :S, :]
    w = jax.nn.sigmoid(tw[:, :S, :])
    return f_enc * w, b_enc * w[:, ::-1, :]


def _run_case(key, batch, seq, hidden_dim, max_len):
    k1, k2, k3, k4 = jax.random.split(key, 4)
    fpe = jax.random.normal(k1, (1, max_len, hidden_dim), dtype=jnp.float32) * 0.01
    bpe = jax.random.normal(k2, (1, max_len, hidden_dim), dtype=jnp.float32) * 0.01
    tw = jnp.ones((1, max_len, 1), dtype=jnp.float32)
    ff = jax.random.normal(k3, (batch, seq, hidden_dim), dtype=jnp.float32)
    bf = jax.random.normal(k4, (batch, seq, hidden_dim), dtype=jnp.float32)

    fo, bo = bilstm_positional_encoding(ff, bf, fpe, bpe, tw)
    jax.block_until_ready((fo, bo))

    ref_f, ref_b = _reference(ff, bf, fpe, bpe, tw)
    assert jnp.allclose(fo, ref_f, atol=1e-5, rtol=1e-5)
    assert jnp.allclose(bo, ref_b, atol=1e-5, rtol=1e-5)


if __name__ == "__main__":
    key = jax.random.PRNGKey(0)
    k_a, k_b = jax.random.split(key)

    # Primary case: module-consistent small shapes (S*H = 256, lane-aligned).
    _run_case(k_a, batch=2, seq=8, hidden_dim=32, max_len=100)
    # Secondary case: exercises the lane-padding path (S*H = 120 -> pad 128)
    # and a non-sublane-multiple batch.
    _run_case(k_b, batch=33, seq=5, hidden_dim=24, max_len=100)

    print("KERNEL_OK")
</pallas_src>

<mosaic_0001>
module attributes {stable_mosaic.version = 11 : i64} {
  func.func @_bilstm_pos_enc_kernel(%arg0: i32, %arg1: i32, %arg2: memref<2x256xf32, #tpu.memory_space<vmem>>, %arg3: memref<2x256xf32, #tpu.memory_space<vmem>>, %arg4: memref<1x256xf32, #tpu.memory_space<vmem>>, %arg5: memref<1x256xf32, #tpu.memory_space<vmem>>, %arg6: memref<1x256xf32, #tpu.memory_space<vmem>>, %arg7: memref<1x256xf32, #tpu.memory_space<vmem>>, %arg8: memref<2x256xf32, #tpu.memory_space<vmem>>, %arg9: memref<2x256xf32, #tpu.memory_space<vmem>>) attributes {dimension_semantics = [#tpu.dimension_semantics<parallel>, #tpu.dimension_semantics<parallel>], iteration_bounds = array<i64: 1, 1>, scalar_prefetch = 0 : i64, scratch_operands = 0 : i64, tpu.core_type = #tpu.core_type<tc>, window_params = [{transform_indices = @transform_0, window_bounds = array<i64: 2, 256>}, {transform_indices = @transform_1, window_bounds = array<i64: 2, 256>}, {transform_indices = @transform_2, window_bounds = array<i64: 1, 256>}, {transform_indices = @transform_3, window_bounds = array<i64: 1, 256>}, {transform_indices = @transform_4, window_bounds = array<i64: 1, 256>}, {transform_indices = @transform_5, window_bounds = array<i64: 1, 256>}, {transform_indices = @transform_6, window_bounds = array<i64: 2, 256>}, {transform_indices = @transform_7, window_bounds = array<i64: 2, 256>}]} {
    %c0 = arith.constant 0 : index
    %c0_0 = arith.constant 0 : index
    %0 = vector.load %arg6[%c0, %c0_0] : memref<1x256xf32, #tpu.memory_space<vmem>>, vector<1x256xf32>
    %1 = arith.negf %0 : vector<1x256xf32>
    %2 = math.exp %1 : vector<1x256xf32>
    %cst = arith.constant 1.000000e+00 : f32
    %3 = vector.broadcast %cst : f32 to vector<1x256xf32>
    %4 = arith.addf %3, %2 : vector<1x256xf32>
    %5 = arith.divf %3, %4 : vector<1x256xf32>
    %c0_1 = arith.constant 0 : index
    %c0_2 = arith.constant 0 : index
    %6 = vector.load %arg7[%c0_1, %c0_2] : memref<1x256xf32, #tpu.memory_space<vmem>>, vector<1x256xf32>
    %7 = arith.negf %6 : vector<1x256xf32>
    %8 = math.exp %7 : vector<1x256xf32>
    %cst_3 = arith.constant 1.000000e+00 : f32
    %9 = vector.broadcast %cst_3 : f32 to vector<1x256xf32>
    %10 = arith.addf %9, %8 : vector<1x256xf32>
    %11 = arith.divf %9, %10 : vector<1x256xf32>
    %c0_4 = arith.constant 0 : index
    %c0_5 = arith.constant 0 : index
    %12 = vector.load %arg2[%c0_4, %c0_5] : memref<2x256xf32, #tpu.memory_space<vmem>>, vector<2x256xf32>
    %c0_6 = arith.constant 0 : index
    %c0_7 = arith.constant 0 : index
    %13 = vector.load %arg4[%c0_6, %c0_7] : memref<1x256xf32, #tpu.memory_space<vmem>>, vector<1x256xf32>
    %14 = vector.broadcast %13 : vector<1x256xf32> to vector<2x256xf32>
    %15 = arith.addf %12, %14 : vector<2x256xf32>
    %16 = vector.broadcast %5 : vector<1x256xf32> to vector<2x256xf32>
    %17 = arith.mulf %15, %16 : vector<2x256xf32>
    %c0_8 = arith.constant 0 : index
    %c0_9 = arith.constant 0 : index
    %18 = vector.load %arg8[%c0_8, %c0_9] : memref<2x256xf32, #tpu.memory_space<vmem>>, vector<2x256xf32>
    tpu.vector_store %arg8[%c0_8, %c0_9], %17 {strides = array<i32>} : memref<2x256xf32, #tpu.memory_space<vmem>>, vector<2x256xf32>,
    %c0_10 = arith.constant 0 : index
    %c0_11 = arith.constant 0 : index
    %19 = vector.load %arg3[%c0_10, %c0_11] : memref<2x256xf32, #tpu.memory_space<vmem>>, vector<2x256xf32>
    %c0_12 = arith.constant 0 : index
    %c0_13 = arith.constant 0 : index
    %20 = vector.load %arg5[%c0_12, %c0_13] : memref<1x256xf32, #tpu.memory_space<vmem>>, vector<1x256xf32>
    %21 = vector.broadcast %20 : vector<1x256xf32> to vector<2x256xf32>
    %22 = arith.addf %19, %21 : vector<2x256xf32>
    %23 = vector.broadcast %11 : vector<1x256xf32> to vector<2x256xf32>
    %24 = arith.mulf %22, %23 : vector<2x256xf32>
    %c0_14 = arith.constant 0 : index
    %c0_15 = arith.constant 0 : index
    %25 = vector.load %arg9[%c0_14, %c0_15] : memref<2x256xf32, #tpu.memory_space<vmem>>, vector<2x256xf32>
    tpu.vector_store %arg9[%c0_14, %c0_15], %24 {strides = array<i32>} : memref<2x256xf32, #tpu.memory_space<vmem>>, vector<2x256xf32>,
    return
  }
  func.func @transform_0(%arg0: i32, %arg1: i32) -> (i32, i32) {
    %c0_i32 = arith.constant 0 : i32
    return %arg0, %arg1 : i32, i32
  }
  func.func @transform_1(%arg0: i32, %arg1: i32) -> (i32, i32) {
    %c0_i32 = arith.constant 0 : i32
    return %arg0, %arg1 : i32, i32
  }
  func.func @transform_2(%arg0: i32, %arg1: i32) -> (i32, i32) {
    %c0_i32 = arith.constant 0 : i32
    %c0_i32_0 = arith.constant 0 : i32
    return %c0_i32, %arg1 : i32, i32
  }
  func.func @transform_3(%arg0: i32, %arg1: i32) -> (i32, i32) {
    %c0_i32 = arith.constant 0 : i32
    %c0_i32_0 = arith.constant 0 : i32
    return %c0_i32, %arg1 : i32, i32
  }
  func.func @transform_4(%arg0: i32, %arg1: i32) -> (i32, i32) {
    %c0_i32 = arith.constant 0 : i32
    %c0_i32_0 = arith.constant 0 : i32
    return %c0_i32, %arg1 : i32, i32
  }
  func.func @transform_5(%arg0: i32, %arg1: i32) -> (i32, i32) {
    %c0_i32 = arith.constant 0 : i32
    %c0_i32_0 = arith.constant 0 : i32
    return %c0_i32, %arg1 : i32, i32
  }
  func.func @transform_6(%arg0: i32, %arg1: i32) -> (i32, i32) {
    %c0_i32 = arith.constant 0 : i32
    return %arg0, %arg1 : i32, i32
  }
  func.func @transform_7(%arg0: i32, %arg1: i32) -> (i32, i32) {
    %c0_i32 = arith.constant 0 : i32
    return %arg0, %arg1 : i32, i32
  }
}

</mosaic_0001>

<llo_original>
// kernel: tpu_custom_call.1
$region0: #{tpu_custom_call.1}
  #allocation0 [shape = 'u32[]', space=smem, size = 0x4, offset = 0x4, fixed_abs, tag = 'smem constant byte address 0x4 - core index']
  #allocation1 [shape = 'u32[144,128]{1,0:T(1,128)}', space=vmem, size = 0x12000, scoped, tag = 'internal scratch']
  %s0 = inlined_call_operand.hbm [shape: f32[2,256], index: 0, kind: input, shape index: {}]
  %s1 = inlined_call_operand.hbm [shape: f32[2,256], index: 1, kind: input, shape index: {}]
  %s2 = inlined_call_operand.vmem [shape: f32[1,256], index: 2, kind: input, shape index: {}]
  %s3 = inlined_call_operand.vmem [shape: f32[1,256], index: 3, kind: input, shape index: {}]
  %s4 = inlined_call_operand.vmem [shape: f32[1,256], index: 4, kind: input, shape index: {}]
  %s5 = inlined_call_operand.vmem [shape: f32[1,256], index: 5, kind: input, shape index: {}]
  %s6 = inlined_call_operand.hbm [shape: f32[2,256], index: 6, kind: output, shape index: {0}]
  %s7 = inlined_call_operand.hbm [shape: f32[2,256], index: 7, kind: output, shape index: {1}]
  %8 = xla_tuple %s6, %s7
  %s9 = sld [smem:[#allocation0]]
  $region50: #{tpu_custom_call.1} parent=0
    _
  %s11 = ssub.s32 1, %s9
  %s12 = scalar_select 0, %s11, %s9
  $region1: #{tpu_custom_call.1} parent=0
    #allocation2 [shape = 'u8[2048]{0}', space=vmem, size = 0x800, scoped, tag = 'input window, operand 0, single buffered']
    #allocation3 [shape = 's32[1]{0}', space=sflag, size = 0x4, scoped, tag = 'scoped memory for tpu_custom_call.1']
    #allocation4 [shape = 's32[1]{0}', space=sflag, size = 0x4, scoped, tag = 'scoped memory for tpu_custom_call.1']
    #allocation5 [shape = 'u8[2048]{0}', space=vmem, size = 0x800, scoped, tag = 'input window, operand 1, single buffered']
    #allocation6 [shape = 's32[1]{0}', space=sflag, size = 0x4, scoped, tag = 'scoped memory for tpu_custom_call.1']
    #allocation7 [shape = 'u8[2048]{0}', space=vmem, size = 0x800, scoped, tag = 'output window, operand 0, single buffered']
    #allocation8 [shape = 'u8[2048]{0}', space=vmem, size = 0x800, scoped, tag = 'output window, operand 1, single buffered']
    #allocation9 [shape = 's32[1]{0}', space=sflag, size = 0x4, scoped, tag = 'scoped memory for tpu_custom_call.1']
    %13 = vsyncpa [#allocation3], 0
    %14 = vsyncpa [#allocation6], 0
    %15 = vsyncpa [#allocation4], 0
    %16 = vsyncpa [#allocation9], 0
    // Predicated region
    $region2: #{tpu_custom_call.1} parent=1 // pred_check
      _
    $region3: #{tpu_custom_call.1} parent=1 // pred_check_branch
      %18 = sbr.rel (0) target = $region5
    $region4: #{tpu_custom_call.1} parent=1 // pred_region
      %s20 = ssub.s32 64, 64
      %21 = vsyncadd [#allocation3], %s20
      %s23 = sshll.u32 [#allocation2], 4
      %s24 = int_to_ptr.vmem [resolvable:$true] %s23
      %26 = dma.hbm_to_vmem [thread:$0]  %s0, 64, %s24, [#allocation3]
    $region5: #{tpu_custom_call.1} parent=1 // pred_fallthru
      _
    // Predicated region
    $region6: #{tpu_custom_call.1} parent=1 // pred_check
      _
    $region7: #{tpu_custom_call.1} parent=1 // pred_check_branch
      %28 = sbr.rel (0) target = $region9
    $region8: #{tpu_custom_call.1} parent=1 // pred_region
      %s30 = ssub.s32 64, 64
      %31 = vsyncadd [#allocation6], %s30
      %s33 = sshll.u32 [#allocation5], 4
      %s34 = int_to_ptr.vmem [resolvable:$true] %s33
      %36 = dma.hbm_to_vmem [thread:$0]  %s1, 64, %s34, [#allocation6]
    $region9: #{tpu_custom_call.1} parent=1 // pred_fallthru
      _
    // Predicated region
    $region10: #{tpu_custom_call.1} parent=1 // pred_check
      _
    $region11: #{tpu_custom_call.1} parent=1 // pred_check_branch
      %38 = sbr.rel (0) target = $region13
    $region12: #{tpu_custom_call.1} parent=1 // pred_region
      _
    $region13: #{tpu_custom_call.1} parent=1 // pred_fallthru
      _
    // Predicated region
    $region14: #{tpu_custom_call.1} parent=1 // pred_check
      _
    $region15: #{tpu_custom_call.1} parent=1 // pred_check_branch
      %40 = sbr.rel (0) target = $region17
    $region16: #{tpu_custom_call.1} parent=1 // pred_region
      _
    $region17: #{tpu_custom_call.1} parent=1 // pred_fallthru
      _
    // Predicated region
    $region18: #{tpu_custom_call.1} parent=1 // pred_check
      _
    $region19: #{tpu_custom_call.1} parent=1 // pred_check_branch
      %42 = sbr.rel (0) target = $region21
    $region20: #{tpu_custom_call.1} parent=1 // pred_region
      _
    $region21: #{tpu_custom_call.1} parent=1 // pred_fallthru
      _
    // Predicated region
    $region22: #{tpu_custom_call.1} parent=1 // pred_check
      _
    $region23: #{tpu_custom_call.1} parent=1 // pred_check_branch
      %44 = sbr.rel (0) target = $region25
    $region24: #{tpu_custom_call.1} parent=1 // pred_region
      _
    $region25: #{tpu_custom_call.1} parent=1 // pred_fallthru
      _
    // Predicated region
    $region26: #{tpu_custom_call.1} parent=1 // pred_check
      _
    $region27: #{tpu_custom_call.1} parent=1 // pred_check_branch
      %46 = sbr.rel (0) target = $region29
    $region28: #{tpu_custom_call.1} parent=1 // pred_region
      %47 = dma.done [#allocation3], 64
    $region29: #{tpu_custom_call.1} parent=1 // pred_fallthru
      _
    // Predicated region
    $region30: #{tpu_custom_call.1} parent=1 // pred_check
      _
    $region31: #{tpu_custom_call.1} parent=1 // pred_check_branch
      %49 = sbr.rel (0) target = $region33
    $region32: #{tpu_custom_call.1} parent=1 // pred_region
      %50 = dma.done [#allocation6], 64
    $region33: #{tpu_custom_call.1} parent=1 // pred_fallthru
      _
    %v51 = vld [vmem:[%s4] sm:$0x3]
    %v52 = vxor.u32 %v51, 2147483648
    %v53 = vmul.f32 %v52, 1.442695
    %v54 = vpow.pop %v53
    %v55 = vadd.f32 %v54, 1.0
    %v56 = vrcp.pop %v55
    %v57 = vmul.f32 1.0, %v56
    %v58 = vld [vmem:[%s5] sm:$0x3]
    %v59 = vxor.u32 %v58, 2147483648
    %v60 = vmul.f32 %v59, 1.442695
    %v61 = vpow.pop %v60
    %v62 = vadd.f32 %v61, 1.0
    %v63 = vrcp.pop %v62
    %v64 = vmul.f32 1.0, %v63
    %v65 = vld [vmem:[#allocation2] sm:$0xf]
    %v66 = vld [vmem:[%s2] sm:$0x3]
    %v68 = vlaneseq
    %v69 = vshrl.u32 %v68, 7
    %v70 = vsub.s32 0, %v69
    %v71 = vrot.slane %v66, %v70
    %v72 = vlaneseq
    %v73 = vshrl.u32 %v72, 7
    %v74 = vsub.s32 1, %v73
    %v75 = vrot.slane %v66, %v74
    %v76 = vcombine.low %v71, %v75
    %v78 = vunpack.c.l.s4 1983009808
    %v79 = vunpack.c.0.s8 %v78
    %v80 = vlaneseq
    %v81 = vshrl.u32 %v80, 7
    %v82 = vsub.s32 %v79, %v81
    %v83 = vrot.slane %v76, %v82
    %v85 = vadd.f32 %v65, %v83
    %v87 = vlaneseq
    %v88 = vshrl.u32 %v87, 7
    %v89 = vsub.s32 0, %v88
    %v90 = vrot.slane %v57, %v89
    %v91 = vlaneseq
    %v92 = vshrl.u32 %v91, 7
    %v93 = vsub.s32 1, %v92
    %v94 = vrot.slane %v57, %v93
    %v95 = vcombine.low %v90, %v94
    %v97 = vunpack.c.l.s4 1983009808
    %v98 = vunpack.c.0.s8 %v97
    %v99 = vlaneseq
    %v100 = vshrl.u32 %v99, 7
    %v101 = vsub.s32 %v98, %v100
    %v102 = vrot.slane %v95, %v101
    %v104 = vmul.f32 %v85, %v102
    %105 = vst [vmem:[#allocation7] sm:$0xf] %v104
    %v106 = vld [vmem:[#allocation5] sm:$0xf]
    %v107 = vld [vmem:[%s3] sm:$0x3]
    %v109 = vlaneseq
    %v110 = vshrl.u32 %v109, 7
    %v111 = vsub.s32 0, %v110
    %v112 = vrot.slane %v107, %v111
    %v113 = vlaneseq
    %v114 = vshrl.u32 %v113, 7
    %v115 = vsub.s32 1, %v114
    %v116 = vrot.slane %v107, %v115
    %v117 = vcombine.low %v112, %v116
    %v119 = vunpack.c.l.s4 1983009808
    %v120 = vunpack.c.0.s8 %v119
    %v121 = vlaneseq
    %v122 = vshrl.u32 %v121, 7
    %v123 = vsub.s32 %v120, %v122
    %v124 = vrot.slane %v117, %v123
    %v126 = vadd.f32 %v106, %v124
    %v128 = vlaneseq
    %v129 = vshrl.u32 %v128, 7
    %v130 = vsub.s32 0, %v129
    %v131 = vrot.slane %v64, %v130
    %v132 = vlaneseq
    %v133 = vshrl.u32 %v132, 7
    %v134 = vsub.s32 1, %v133
    %v135 = vrot.slane %v64, %v134
    %v136 = vcombine.low %v131, %v135
    %v138 = vunpack.c.l.s4 1983009808
    %v139 = vunpack.c.0.s8 %v138
    %v140 = vlaneseq
    %v141 = vshrl.u32 %v140, 7
    %v142 = vsub.s32 %v139, %v141
    %v143 = vrot.slane %v136, %v142
    %v145 = vmul.f32 %v126, %v143
    %146 = vst [vmem:[#allocation8] sm:$0xf] %v145
    // Predicated region
    $region34: #{tpu_custom_call.1} parent=1 // pred_check
      _
    $region35: #{tpu_custom_call.1} parent=1 // pred_check_branch
      %148 = sbr.rel (0) target = $region37
    $region36: #{tpu_custom_call.1} parent=1 // pred_region
      %s150 = ssub.s32 64, 64
      %151 = vsyncadd [#allocation4], %s150
      %s153 = sshll.u32 [#allocation7], 4
      %s154 = int_to_ptr.vmem [resolvable:$true] %s153
      %156 = dma.vmem_to_hbm [thread:$0]  %s154, 64, %s6, [#allocation4]
    $region37: #{tpu_custom_call.1} parent=1 // pred_fallthru
      _
    // Predicated region
    $region38: #{tpu_custom_call.1} parent=1 // pred_check
      _
    $region39: #{tpu_custom_call.1} parent=1 // pred_check_branch
      %158 = sbr.rel (0) target = $region41
    $region40: #{tpu_custom_call.1} parent=1 // pred_region
      %s160 = ssub.s32 64, 64
      %161 = vsyncadd [#allocation9], %s160
      %s163 = sshll.u32 [#allocation8], 4
      %s164 = int_to_ptr.vmem [resolvable:$true] %s163
      %166 = dma.vmem_to_hbm [thread:$0]  %s164, 64, %s7, [#allocation9]
    $region41: #{tpu_custom_call.1} parent=1 // pred_fallthru
      _
    // Predicated region
    $region42: #{tpu_custom_call.1} parent=1 // pred_check
      _
    $region43: #{tpu_custom_call.1} parent=1 // pred_check_branch
      %168 = sbr.rel (0) target = $region45
    $region44: #{tpu_custom_call.1} parent=1 // pred_region
      %169 = dma.done [#allocation4], 64
    $region45: #{tpu_custom_call.1} parent=1 // pred_fallthru
      _
    // Predicated region
    $region46: #{tpu_custom_call.1} parent=1 // pred_check
      _
    $region47: #{tpu_custom_call.1} parent=1 // pred_check_branch
      %171 = sbr.rel (0) target = $region49
    $region48: #{tpu_custom_call.1} parent=1 // pred_region
      %172 = dma.done [#allocation9], 64
    $region49: #{tpu_custom_call.1} parent=1 // pred_fallthru
      _
    %173 = vsyncpa [#allocation3], 1
    %174 = vsyncpa [#allocation6], 1
    %175 = vsyncpa [#allocation4], 1
    %176 = vsyncpa [#allocation9], 1

</llo_original>
